<compile_context>
chip_gen: v6e
topology: v6e:2x2x1
jax: 0.10.0
libtpu: 0.0.40
codegen_flags: <defaults>
</compile_context>

<pallas_src>
import jax
import jax.numpy as jnp
from jax.experimental import pallas as pl
from jax.experimental.pallas import tpu as pltpu


def rawnet_kernel(x_ref, w1_ref, b1_ref, w2_ref, b2_ref, w3_ref, b3_ref, o_ref):
    # x_ref: (2, TILE_B)   w1: (H, 2)   b1: (H, 1)
    # w2: (H, H)           b2: (H, 1)
    # w3: (H, 1)           b3: (1, 1) in SMEM     o_ref: (1, TILE_B)
    x = x_ref[...]
    w1 = w1_ref[...]

    # Layer 1: K=2 contraction as two VPU broadcast-FMAs (no MXU, no padded-K waste).
    h1 = w1[:, 0:1] * x[0:1, :] + w1[:, 1:2] * x[1:2, :] + b1_ref[...]   # (H, TILE_B)
    h1 = jnp.tanh(h1)

    # Layer 2: H x H matmul on the MXU; result is lane-dense (H, TILE_B).
    # (bf16 operands would cut MXU passes for H >= 256, but at H=32 the MXU is idle
    #  anyway and f32 keeps exact parity with the PyTorch reference.)
    h2 = jnp.dot(w2_ref[...], h1, preferred_element_type=jnp.float32) + b2_ref[...]
    h2 = jnp.tanh(h2)

    # Layer 3: N=1 output as a VPU broadcast-multiply + cross-sublane reduce (XLU),
    # plus a scalar bias from SMEM.
    z = jnp.sum(w3_ref[...] * h2, axis=0, keepdims=True) + b3_ref[0, 0]  # (1, TILE_B)

    # Sigmoid via the EUP: sigmoid(z) = 0.5 * (tanh(z/2) + 1)  (exact identity).
    o_ref[...] = 0.5 * (jnp.tanh(0.5 * z) + 1.0)


def _choose_tile_b(batch, tile_b, max_tile_b):
    """Lane-dense batch tile: one step for small B, capped large tiles for big B."""
    if tile_b is not None:
        return tile_b
    padded = pl.cdiv(batch, 128) * 128        # smallest lane-multiple covering B
    return min(padded, max_tile_b)            # cap keeps v5e scoped-VMEM happy and
                                              # leaves >=2 parallel steps on v7x at large B


def rawnet_forward(x, params, *, tile_b=None, max_tile_b=4096):
    """x: (B, 2) float32 -> (B, 1) float32 sigmoid output."""
    w1, b1, w2, b2, w3, b3 = params
    B = x.shape[0]
    H = w1.shape[0]

    tb = _choose_tile_b(B, tile_b, max_tile_b)
    num_tiles = pl.cdiv(B, tb)
    b_pad = num_tiles * tb

    # Batch lives on the lane (last) dim inside the kernel; fused transpose + pad
    # (no extra dynamic-update-slice HBM pass).
    x_t = jnp.pad(x.T.astype(jnp.float32), ((0, 0), (0, b_pad - B)))

    grid_spec = pltpu.PrefetchScalarGridSpec(
        num_scalar_prefetch=0,
        grid=(num_tiles,),
        in_specs=[
            pl.BlockSpec((2, tb), lambda i: (0, i)),     # x tile (pipelined)
            pl.BlockSpec((H, 2), lambda i: (0, 0)),      # w1 (VMEM-resident)
            pl.BlockSpec((H, 1), lambda i: (0, 0)),      # b1
            pl.BlockSpec((H, H), lambda i: (0, 0)),      # w2
            pl.BlockSpec((H, 1), lambda i: (0, 0)),      # b2
            pl.BlockSpec((H, 1), lambda i: (0, 0)),      # w3 (stored transposed)
            pl.BlockSpec(memory_space=pltpu.MemorySpace.SMEM),  # b3 scalar in SMEM
        ],
        out_specs=pl.BlockSpec((1, tb), lambda i: (0, i)),      # lane-dense output
    )

    # Advisory cost estimate so XLA schedules this call sensibly in larger graphs.
    flops = 2 * b_pad * (2 * H + H * H + H)
    transcendentals = b_pad * (2 * H + 1)
    bytes_accessed = (x_t.size + b_pad + sum(int(p.size) for p in params)) * 4

    out = pl.pallas_call(
        rawnet_kernel,
        out_shape=jax.ShapeDtypeStruct((1, b_pad), jnp.float32),
        grid_spec=grid_spec,
        compiler_params=pltpu.CompilerParams(
            dimension_semantics=("parallel",),   # megacore sharding on v7x
        ),
        cost_estimate=pl.CostEstimate(
            flops=flops,
            transcendentals=transcendentals,
            bytes_accessed=bytes_accessed,
        ),
    )(x_t, w1, b1, w2, b2, w3, b3)

    # Back to the PyTorch (B, 1) convention; drop padding.
    return out[:, :B].reshape(B, 1)


def init_params(key, num_hid):
    """PyTorch nn.Linear default init: U(-1/sqrt(fan_in), 1/sqrt(fan_in)).

    Stored in the kernel's transposed layout:
      w1 (H, 2), b1 (H, 1), w2 (H, H), b2 (H, 1), w3 (H, 1), b3 (1, 1)
    """
    keys = jax.random.split(key, 6)

    def linear(kw, kb, fan_in, fan_out):
        bound = 1.0 / jnp.sqrt(jnp.float32(fan_in))
        w = jax.random.uniform(kw, (fan_out, fan_in), jnp.float32, -bound, bound)
        b = jax.random.uniform(kb, (fan_out, 1), jnp.float32, -bound, bound)
        return w, b

    w1, b1 = linear(keys[0], keys[1], 2, num_hid)        # (H, 2), (H, 1)
    w2, b2 = linear(keys[2], keys[3], num_hid, num_hid)  # (H, H), (H, 1)
    w3t, b3 = linear(keys[4], keys[5], num_hid, 1)       # (1, H), (1, 1)
    return (w1, b1, w2, b2, w3t.T, b3)                   # store w3 as (H, 1)


def rawnet_reference(x, params):
    """Pure-JAX reference (standard batch-on-rows formulation)."""
    w1, b1, w2, b2, w3, b3 = params
    h1 = jnp.tanh(x @ w1.T + b1.T)
    h2 = jnp.tanh(h1 @ w2.T + b2.T)
    return jax.nn.sigmoid(h2 @ w3 + b3)


if __name__ == "__main__":
    num_hid = 32
    key = jax.random.PRNGKey(0)
    k_x, k_p, k_x2 = jax.random.split(key, 3)
    params = init_params(k_p, num_hid)

    # Case 1: shipped small batch (B=200) -> pads to 256, single grid step.
    x = jax.random.normal(k_x, (200, 2), jnp.float32)
    out = jax.block_until_ready(rawnet_forward(x, params))
    ref = rawnet_reference(x, params)
    assert out.shape == (200, 1)
    assert jnp.allclose(out, ref, atol=1e-5, rtol=1e-5)

    # Case 2: exercise the multi-tile (grid > 1) pipelined path.
    x2 = jax.random.normal(k_x2, (1000, 2), jnp.float32)
    out2 = jax.block_until_ready(rawnet_forward(x2, params, tile_b=512))
    ref2 = rawnet_reference(x2, params)
    assert out2.shape == (1000, 1)
    assert jnp.allclose(out2, ref2, atol=1e-5, rtol=1e-5)

    print("KERNEL_OK")
</pallas_src>

<mosaic_0001>
module attributes {stable_mosaic.version = 11 : i64} {
  func.func @rawnet_kernel(%arg0: i32, %arg1: memref<2x256xf32, #tpu.memory_space<vmem>>, %arg2: memref<32x2xf32, #tpu.memory_space<vmem>>, %arg3: memref<32x1xf32, #tpu.memory_space<vmem>>, %arg4: memref<32x32xf32, #tpu.memory_space<vmem>>, %arg5: memref<32x1xf32, #tpu.memory_space<vmem>>, %arg6: memref<32x1xf32, #tpu.memory_space<vmem>>, %arg7: memref<1x1xf32, #tpu.memory_space<smem>>, %arg8: memref<1x256xf32, #tpu.memory_space<vmem>>) attributes {dimension_semantics = [#tpu.dimension_semantics<parallel>], iteration_bounds = array<i64: 1>, scalar_prefetch = 0 : i64, scratch_operands = 0 : i64, tpu.core_type = #tpu.core_type<tc>, window_params = [{transform_indices = @transform_0, window_bounds = array<i64: 2, 256>}, {pipeline_mode = #tpu.pipeline_mode<synchronous>, transform_indices = @transform_1, window_bounds = array<i64: 32, 2>}, {pipeline_mode = #tpu.pipeline_mode<synchronous>, transform_indices = @transform_2, window_bounds = array<i64: 32, 1>}, {pipeline_mode = #tpu.pipeline_mode<synchronous>, transform_indices = @transform_3, window_bounds = array<i64: 32, 32>}, {pipeline_mode = #tpu.pipeline_mode<synchronous>, transform_indices = @transform_4, window_bounds = array<i64: 32, 1>}, {pipeline_mode = #tpu.pipeline_mode<synchronous>, transform_indices = @transform_5, window_bounds = array<i64: 32, 1>}, {transform_indices = @transform_6, window_bounds = array<i64: 1, 1>}, {transform_indices = @transform_7, window_bounds = array<i64: 1, 256>}]} {
    %c0 = arith.constant 0 : index
    %c0_0 = arith.constant 0 : index
    %0 = vector.load %arg1[%c0, %c0_0] : memref<2x256xf32, #tpu.memory_space<vmem>>, vector<2x256xf32>
    %c0_1 = arith.constant 0 : index
    %c0_2 = arith.constant 0 : index
    %1 = vector.load %arg2[%c0_1, %c0_2] : memref<32x2xf32, #tpu.memory_space<vmem>>, vector<32x2xf32>
    %2 = vector.extract_strided_slice %1 {offsets = [0, 0], sizes = [32, 1], strides = [1, 1]} : vector<32x2xf32> to vector<32x1xf32>
    %3 = vector.extract_strided_slice %0 {offsets = [0, 0], sizes = [1, 256], strides = [1, 1]} : vector<2x256xf32> to vector<1x256xf32>
    %4 = vector.broadcast %2 : vector<32x1xf32> to vector<32x256xf32>
    %5 = vector.broadcast %3 : vector<1x256xf32> to vector<32x256xf32>
    %6 = arith.mulf %4, %5 : vector<32x256xf32>
    %7 = vector.extract_strided_slice %1 {offsets = [0, 1], sizes = [32, 1], strides = [1, 1]} : vector<32x2xf32> to vector<32x1xf32>
    %8 = vector.extract_strided_slice %0 {offsets = [1, 0], sizes = [1, 256], strides = [1, 1]} : vector<2x256xf32> to vector<1x256xf32>
    %9 = vector.broadcast %7 : vector<32x1xf32> to vector<32x256xf32>
    %10 = vector.broadcast %8 : vector<1x256xf32> to vector<32x256xf32>
    %11 = arith.mulf %9, %10 : vector<32x256xf32>
    %12 = arith.addf %6, %11 : vector<32x256xf32>
    %c0_3 = arith.constant 0 : index
    %c0_4 = arith.constant 0 : index
    %13 = vector.load %arg3[%c0_3, %c0_4] : memref<32x1xf32, #tpu.memory_space<vmem>>, vector<32x1xf32>
    %14 = vector.broadcast %13 : vector<32x1xf32> to vector<32x256xf32>
    %15 = arith.addf %12, %14 : vector<32x256xf32>
    %16 = math.tanh %15 : vector<32x256xf32>
    %c0_5 = arith.constant 0 : index
    %c0_6 = arith.constant 0 : index
    %17 = vector.load %arg4[%c0_5, %c0_6] : memref<32x32xf32, #tpu.memory_space<vmem>>, vector<32x32xf32>
    %cst = arith.constant dense<0.000000e+00> : vector<32x256xf32>
    %18 = tpu.matmul %17, %16, %cst {dimension_numbers = #tpu.dot_dimension_numbers<[1], [0], [0], [1], [0, 0, 1, 1], [], []>} : vector<32x32xf32>, vector<32x256xf32>, vector<32x256xf32> -> vector<32x256xf32>
    %c0_7 = arith.constant 0 : index
    %c0_8 = arith.constant 0 : index
    %19 = vector.load %arg5[%c0_7, %c0_8] : memref<32x1xf32, #tpu.memory_space<vmem>>, vector<32x1xf32>
    %20 = vector.broadcast %19 : vector<32x1xf32> to vector<32x256xf32>
    %21 = arith.addf %18, %20 : vector<32x256xf32>
    %22 = math.tanh %21 : vector<32x256xf32>
    %c0_9 = arith.constant 0 : index
    %c0_10 = arith.constant 0 : index
    %23 = vector.load %arg6[%c0_9, %c0_10] : memref<32x1xf32, #tpu.memory_space<vmem>>, vector<32x1xf32>
    %24 = vector.broadcast %23 : vector<32x1xf32> to vector<32x256xf32>
    %25 = arith.mulf %24, %22 : vector<32x256xf32>
    %cst_11 = arith.constant dense<0.000000e+00> : vector<256xf32>
    %26 = vector.multi_reduction <add>, %25, %cst_11 [0] : vector<32x256xf32> to vector<256xf32>
    %27 = vector.shape_cast %26 : vector<256xf32> to vector<1x256xf32>
    %c0_12 = arith.constant 0 : index
    %c0_13 = arith.constant 0 : index
    %28 = memref.load %arg7[%c0_12, %c0_13] : memref<1x1xf32, #tpu.memory_space<smem>>
    %29 = vector.broadcast %28 : f32 to vector<1x256xf32>
    %30 = arith.addf %27, %29 : vector<1x256xf32>
    %cst_14 = arith.constant 5.000000e-01 : f32
    %31 = vector.broadcast %cst_14 : f32 to vector<1x256xf32>
    %32 = arith.mulf %31, %30 : vector<1x256xf32>
    %33 = math.tanh %32 : vector<1x256xf32>
    %cst_15 = arith.constant 1.000000e+00 : f32
    %34 = vector.broadcast %cst_15 : f32 to vector<1x256xf32>
    %35 = arith.addf %33, %34 : vector<1x256xf32>
    %cst_16 = arith.constant 5.000000e-01 : f32
    %36 = vector.broadcast %cst_16 : f32 to vector<1x256xf32>
    %37 = arith.mulf %36, %35 : vector<1x256xf32>
    %c0_17 = arith.constant 0 : index
    %c0_18 = arith.constant 0 : index
    %38 = vector.load %arg8[%c0_17, %c0_18] : memref<1x256xf32, #tpu.memory_space<vmem>>, vector<1x256xf32>
    tpu.vector_store %arg8[%c0_17, %c0_18], %37 {strides = array<i32>} : memref<1x256xf32, #tpu.memory_space<vmem>>, vector<1x256xf32>,
    return
  }
  func.func @transform_0(%arg0: i32) -> (i32, i32) {
    %c0_i32 = arith.constant 0 : i32
    %c0_i32_0 = arith.constant 0 : i32
    return %c0_i32, %arg0 : i32, i32
  }
  func.func @transform_1(%arg0: i32) -> (i32, i32) {
    %c0_i32 = arith.constant 0 : i32
    %c0_i32_0 = arith.constant 0 : i32
    %c0_i32_1 = arith.constant 0 : i32
    return %c0_i32, %c0_i32_0 : i32, i32
  }
  func.func @transform_2(%arg0: i32) -> (i32, i32) {
    %c0_i32 = arith.constant 0 : i32
    %c0_i32_0 = arith.constant 0 : i32
    %c0_i32_1 = arith.constant 0 : i32
    return %c0_i32, %c0_i32_0 : i32, i32
  }
  func.func @transform_3(%arg0: i32) -> (i32, i32) {
    %c0_i32 = arith.constant 0 : i32
    %c0_i32_0 = arith.constant 0 : i32
    %c0_i32_1 = arith.constant 0 : i32
    return %c0_i32, %c0_i32_0 : i32, i32
  }
  func.func @transform_4(%arg0: i32) -> (i32, i32) {
    %c0_i32 = arith.constant 0 : i32
    %c0_i32_0 = arith.constant 0 : i32
    %c0_i32_1 = arith.constant 0 : i32
    return %c0_i32, %c0_i32_0 : i32, i32
  }
  func.func @transform_5(%arg0: i32) -> (i32, i32) {
    %c0_i32 = arith.constant 0 : i32
    %c0_i32_0 = arith.constant 0 : i32
    %c0_i32_1 = arith.constant 0 : i32
    return %c0_i32, %c0_i32_0 : i32, i32
  }
  func.func @transform_6(%arg0: i32) -> (i32, i32) {
    %c0_i32 = arith.constant 0 : i32
    %c0_i32_0 = arith.constant 0 : i32
    %c0_i32_1 = arith.constant 0 : i32
    return %c0_i32, %c0_i32_0 : i32, i32
  }
  func.func @transform_7(%arg0: i32) -> (i32, i32) {
    %c0_i32 = arith.constant 0 : i32
    %c0_i32_0 = arith.constant 0 : i32
    return %c0_i32, %arg0 : i32, i32
  }
}

</mosaic_0001>

<llo_original>
// kernel: tpu_custom_call.1
$region0: #{tpu_custom_call.1}
  #allocation0 [shape = 'u32[]', space=smem, size = 0x4, offset = 0x4, fixed_abs, tag = 'smem constant byte address 0x4 - core index']
  #allocation1 [shape = 'u32[144,128]{1,0:T(1,128)}', space=vmem, size = 0x12000, scoped, tag = 'internal scratch']
  #allocation2 [shape = 'f32[1,1]{1,0:T(1,128)S(6)}', space=smem, size = 0x200, scoped, tag = 'scoped memory for tpu_custom_call.1']
  %s0 = inlined_call_operand.vmem [shape: f32[2,256], index: 0, kind: input, shape index: {}]
  %s1 = inlined_call_operand.vmem [shape: f32[32,2], index: 1, kind: input, shape index: {}]
  %s2 = inlined_call_operand.vmem [shape: f32[32,1], index: 2, kind: input, shape index: {}]
  %s3 = inlined_call_operand.vmem [shape: f32[32,32], index: 3, kind: input, shape index: {}]
  %s4 = inlined_call_operand.vmem [shape: f32[32,1], index: 4, kind: input, shape index: {}]
  %s5 = inlined_call_operand.vmem [shape: f32[32,1], index: 5, kind: input, shape index: {}]
  %s6 = inlined_call_operand.<no memory space> [shape: f32[1,1], index: 6, kind: input, shape index: {}]
  %s7 = inlined_call_operand.hbm [shape: f32[1,256], index: 7, kind: output, shape index: {}]
  %s8 = sld [smem:[#allocation0]]
  $region38: #{tpu_custom_call.1} parent=0
    _
  %s10 = ssub.s32 1, %s8
  %s11 = scalar_select 0, %s10, %s8
  %12 = sst [smem:[#allocation2]] %s6
  $region1: #{tpu_custom_call.1} parent=0
    #allocation3 [shape = 'u8[1024]{0}', space=vmem, size = 0x400, scoped, tag = 'output window, operand 0, single buffered']
    #allocation4 [shape = 's32[1]{0}', space=sflag, size = 0x4, scoped, tag = 'scoped memory for tpu_custom_call.1']
    %13 = vsyncpa [#allocation4], 0
    // Predicated region
    $region2: #{tpu_custom_call.1} parent=1 // pred_check
      _
    $region3: #{tpu_custom_call.1} parent=1 // pred_check_branch
      %15 = sbr.rel (0) target = $region5
    $region4: #{tpu_custom_call.1} parent=1 // pred_region
      _
    $region5: #{tpu_custom_call.1} parent=1 // pred_fallthru
      _
    // Predicated region
    $region6: #{tpu_custom_call.1} parent=1 // pred_check
      _
    $region7: #{tpu_custom_call.1} parent=1 // pred_check_branch
      %17 = sbr.rel (0) target = $region9
    $region8: #{tpu_custom_call.1} parent=1 // pred_region
      _
    $region9: #{tpu_custom_call.1} parent=1 // pred_fallthru
      _
    // Predicated region
    $region10: #{tpu_custom_call.1} parent=1 // pred_check
      _
    $region11: #{tpu_custom_call.1} parent=1 // pred_check_branch
      %19 = sbr.rel (0) target = $region13
    $region12: #{tpu_custom_call.1} parent=1 // pred_region
      _
    $region13: #{tpu_custom_call.1} parent=1 // pred_fallthru
      _
    // Predicated region
    $region14: #{tpu_custom_call.1} parent=1 // pred_check
      _
    $region15: #{tpu_custom_call.1} parent=1 // pred_check_branch
      %21 = sbr.rel (0) target = $region17
    $region16: #{tpu_custom_call.1} parent=1 // pred_region
      _
    $region17: #{tpu_custom_call.1} parent=1 // pred_fallthru
      _
    // Predicated region
    $region18: #{tpu_custom_call.1} parent=1 // pred_check
      _
    $region19: #{tpu_custom_call.1} parent=1 // pred_check_branch
      %23 = sbr.rel (0) target = $region21
    $region20: #{tpu_custom_call.1} parent=1 // pred_region
      _
    $region21: #{tpu_custom_call.1} parent=1 // pred_fallthru
      _
    // Predicated region
    $region22: #{tpu_custom_call.1} parent=1 // pred_check
      _
    $region23: #{tpu_custom_call.1} parent=1 // pred_check_branch
      %25 = sbr.rel (0) target = $region25
    $region24: #{tpu_custom_call.1} parent=1 // pred_region
      _
    $region25: #{tpu_custom_call.1} parent=1 // pred_fallthru
      _
    // Predicated region
    $region26: #{tpu_custom_call.1} parent=1 // pred_check
      _
    $region27: #{tpu_custom_call.1} parent=1 // pred_check_branch
      %27 = sbr.rel (0) target = $region29
    $region28: #{tpu_custom_call.1} parent=1 // pred_region
      _
    $region29: #{tpu_custom_call.1} parent=1 // pred_fallthru
      _
    %v28 = vld [vmem:[%s0] sm:$0xf]
    %v29 = vld [vmem:[%s1] sm:$0xff]
    %v30 = vld [vmem:[%s1 + $0x8] sm:$0xff]
    %v31 = vld [vmem:[%s1 + $0x10] sm:$0xff]
    %v32 = vld [vmem:[%s1 + $0x18] sm:$0xff]
    %34 = vset.pattern.permute.xlu0 0
    %35 = vperm.xlu0 %34, %v29
    %v36 = vpop.permute.xlu0 %35
    %39 = vset.pattern.permute.xlu0 0
    %40 = vperm.xlu0 %39, %v30
    %v41 = vpop.permute.xlu0 %40
    %44 = vset.pattern.permute.xlu0 0
    %45 = vperm.xlu0 %44, %v31
    %v46 = vpop.permute.xlu0 %45
    %49 = vset.pattern.permute.xlu0 0
    %50 = vperm.xlu0 %49, %v32
    %v51 = vpop.permute.xlu0 %50
    %v54 = vlaneseq
    %v55 = vshrl.u32 %v54, 7
    %v56 = vsub.s32 0, %v55
    %v57 = vrot.slane %v28, %v56
    %v58 = vlaneseq
    %v59 = vshrl.u32 %v58, 7
    %v60 = vsub.s32 2, %v59
    %v61 = vrot.slane %v28, %v60
    %v64 = vlaneseq
    %v65 = vshrl.u32 %v64, 7
    %v66 = vsub.s32 0, %v65
    %v67 = vrot.slane %v57, %v66
    %v68 = vlaneseq
    %v69 = vshrl.u32 %v68, 7
    %v70 = vsub.s32 0, %v69
    %v71 = vrot.slane %v61, %v70
    %v72 = vmul.f32 %v36, %v67
    %v73 = vmul.f32 %v36, %v71
    %v74 = vmul.f32 %v41, %v67
    %v75 = vmul.f32 %v41, %v71
    %v76 = vmul.f32 %v46, %v67
    %v77 = vmul.f32 %v46, %v71
    %v78 = vmul.f32 %v51, %v67
    %v79 = vmul.f32 %v51, %v71
    %80 = vset.pattern.permute.xlu0 1
    %81 = vperm.xlu0 %80, %v29
    %v82 = vpop.permute.xlu0 %81
    %84 = vset.pattern.permute.xlu0 1
    %85 = vperm.xlu0 %84, %v30
    %v86 = vpop.permute.xlu0 %85
    %88 = vset.pattern.permute.xlu0 1
    %89 = vperm.xlu0 %88, %v31
    %v90 = vpop.permute.xlu0 %89
    %92 = vset.pattern.permute.xlu0 1
    %93 = vperm.xlu0 %92, %v32
    %v94 = vpop.permute.xlu0 %93
    %v96 = vlaneseq
    %v97 = vshrl.u32 %v96, 7
    %v98 = vsub.s32 1, %v97
    %v99 = vrot.slane %v28, %v98
    %v100 = vlaneseq
    %v101 = vshrl.u32 %v100, 7
    %v102 = vsub.s32 3, %v101
    %v103 = vrot.slane %v28, %v102
    %v106 = vlaneseq
    %v107 = vshrl.u32 %v106, 7
    %v108 = vsub.s32 1, %v107
    %v109 = vrot.slane %v99, %v108
    %v110 = vlaneseq
    %v111 = vshrl.u32 %v110, 7
    %v112 = vsub.s32 1, %v111
    %v113 = vrot.slane %v103, %v112
    %v114 = vmul.f32 %v82, %v109
    %v115 = vmul.f32 %v82, %v113
    %v116 = vmul.f32 %v86, %v109
    %v117 = vmul.f32 %v86, %v113
    %v118 = vmul.f32 %v90, %v109
    %v119 = vmul.f32 %v90, %v113
    %v120 = vmul.f32 %v94, %v109
    %v121 = vmul.f32 %v94, %v113
    %v122 = vadd.f32 %v72, %v114
    %v123 = vadd.f32 %v73, %v115
    %v124 = vadd.f32 %v74, %v116
    %v125 = vadd.f32 %v75, %v117
    %v126 = vadd.f32 %v76, %v118
    %v127 = vadd.f32 %v77, %v119
    %v128 = vadd.f32 %v78, %v120
    %v129 = vadd.f32 %v79, %v121
    %v130 = vld [vmem:[%s2] sm:$0xff]
    %v131 = vld [vmem:[%s2 + $0x8] sm:$0xff]
    %v132 = vld [vmem:[%s2 + $0x10] sm:$0xff]
    %v133 = vld [vmem:[%s2 + $0x18] sm:$0xff]
    %135 = vset.pattern.permute.xlu0 0
    %136 = vperm.xlu0 %135, %v130
    %v137 = vpop.permute.xlu0 %136
    %140 = vset.pattern.permute.xlu0 0
    %141 = vperm.xlu0 %140, %v131
    %v142 = vpop.permute.xlu0 %141
    %145 = vset.pattern.permute.xlu0 0
    %146 = vperm.xlu0 %145, %v132
    %v147 = vpop.permute.xlu0 %146
    %150 = vset.pattern.permute.xlu0 0
    %151 = vperm.xlu0 %150, %v133
    %v152 = vpop.permute.xlu0 %151
    %v154 = vadd.f32 %v122, %v137
    %v155 = vadd.f32 %v123, %v137
    %v156 = vadd.f32 %v124, %v142
    %v157 = vadd.f32 %v125, %v142
    %v158 = vadd.f32 %v126, %v147
    %v159 = vadd.f32 %v127, %v147
    %v160 = vadd.f32 %v128, %v152
    %v161 = vadd.f32 %v129, %v152
    %v162 = vtanh.pop %v154
    %v163 = vtanh.pop %v155
    %v164 = vtanh.pop %v156
    %v165 = vtanh.pop %v157
    %v166 = vtanh.pop %v158
    %v167 = vtanh.pop %v159
    %v168 = vtanh.pop %v160
    %v169 = vtanh.pop %v161
    %v170 = vld [vmem:[%s3] sm:$0xff]
    %v171 = vld [vmem:[%s3 + $0x8] sm:$0xff]
    %v172 = vld [vmem:[%s3 + $0x10] sm:$0xff]
    %v173 = vld [vmem:[%s3 + $0x18] sm:$0xff]
    %v174 = vld [vmem:[%s4] sm:$0xff]
    %v175 = vld [vmem:[%s4 + $0x8] sm:$0xff]
    %v176 = vld [vmem:[%s4 + $0x10] sm:$0xff]
    %v177 = vld [vmem:[%s4 + $0x18] sm:$0xff]
    %179 = vset.pattern.permute.xlu0 0
    %180 = vperm.xlu0 %179, %v174
    %v181 = vpop.permute.xlu0 %180
    %184 = vset.pattern.permute.xlu0 0
    %185 = vperm.xlu0 %184, %v175
    %v186 = vpop.permute.xlu0 %185
    %189 = vset.pattern.permute.xlu0 0
    %190 = vperm.xlu0 %189, %v176
    %v191 = vpop.permute.xlu0 %190
    %194 = vset.pattern.permute.xlu0 0
    %195 = vperm.xlu0 %194, %v177
    %v196 = vpop.permute.xlu0 %195
    %vm198 = vcmask 261120
    %v200 = vsel %vm198, %v170, 0
    %v203 = vsel %vm198, %v171, 0
    %v206 = vsel %vm198, %v172, 0
    %v209 = vsel %vm198, %v173, 0
    %211 = vmatprep.subr.mxu0 0.0
    %212 = vmatpush1.msra.mxu0 0.0
    %213 = vmatprep.subr.mxu0 0.0
    %214 = vmatpush1.msra.mxu0 0.0
    %215 = vmatprep.subr.mxu0 0.0
    %216 = vmatpush1.msra.mxu0 0.0
    %217 = vmatprep.subr.mxu0 0.0
    %218 = vmatpush1.msra.mxu0 0.0
    %219 = vmatprep.subr.mxu0 0.0
    %220 = vmatpush1.msra.mxu0 0.0
    %221 = vmatprep.subr.mxu0 0.0
    %222 = vmatpush1.msra.mxu0 0.0
    %223 = vmatprep.subr.mxu0 0.0
    %224 = vmatpush1.msra.mxu0 0.0
    %225 = vmatprep.subr.mxu0 0.0
    %226 = vmatpush1.msra.mxu0 0.0
    %227 = vmatprep.subr.mxu0 0.0
    %228 = vmatpush1.msra.mxu0 0.0
    %229 = vmatprep.subr.mxu0 0.0
    %230 = vmatpush1.msra.mxu0 0.0
    %231 = vmatprep.subr.mxu0 0.0
    %232 = vmatpush1.msra.mxu0 0.0
    %233 = vmatprep.subr.mxu0 0.0
    %234 = vmatpush1.msra.mxu0 0.0
    %235 = vmatprep.subr.mxu0 %v169
    %236 = vmatpush1.msra.mxu0 %v168
    %237 = vmatprep.subr.mxu0 %v167
    %238 = vmatpush1.msra.mxu0 %v166
    %239 = vmatprep.subr.mxu0 %v165
    %240 = vmatpush1.msra.mxu0 %v164
    %241 = vmatprep.subr.mxu0 %v163
    %242 = vmatpush1.msra.mxu0 %v162
    %243 = vmatprep.subr.mxu0 0.0
    %244 = vmatpush2.msra.mxu0 0.0
    %245 = vmatprep.subr.mxu0 0.0
    %246 = vmatpush2.msra.mxu0 0.0
    %247 = vmatprep.subr.mxu0 0.0
    %248 = vmatpush2.msra.mxu0 0.0
    %249 = vmatprep.subr.mxu0 0.0
    %250 = vmatpush2.msra.mxu0 0.0
    %251 = vmatprep.subr.mxu0 0.0
    %252 = vmatpush2.msra.mxu0 0.0
    %253 = vmatprep.subr.mxu0 0.0
    %254 = vmatpush2.msra.mxu0 0.0
    %255 = vmatprep.subr.mxu0 0.0
    %256 = vmatpush2.msra.mxu0 0.0
    %257 = vmatprep.subr.mxu0 0.0
    %258 = vmatpush2.msra.mxu0 0.0
    %259 = vmatprep.subr.mxu0 0.0
    %260 = vmatpush2.msra.mxu0 0.0
    %261 = vmatprep.subr.mxu0 0.0
    %262 = vmatpush2.msra.mxu0 0.0
    %263 = vmatprep.subr.mxu0 0.0
    %264 = vmatpush2.msra.mxu0 0.0
    %265 = vmatprep.subr.mxu0 0.0
    %266 = vmatpush2.msra.mxu0 0.0
    %267 = vmatprep.subr.mxu0 0.0
    %268 = vmatpush2.msra.mxu0 0.0
    %269 = vmatprep.subr.mxu0 0.0
    %270 = vmatpush2.msra.mxu0 0.0
    %271 = vmatprep.subr.mxu0 0.0
    %272 = vmatpush2.msra.mxu0 0.0
    %273 = vmatprep.subr.mxu0 0.0
    %274 = vmatpush2.msra.mxu0 0.0
    %275 = vmatprep.mubr.f32.mxu0 0.0
    %276 = vmatmul.mubr.f32.gmra.mxu0 %v200
    %v277 = vpop.f32.mrf.mxu0
    %v278 = vadd.f32 %v181, %v277
    %v279 = vpop.f32.mrf.mxu0
    %v280 = vadd.f32 %v181, %v279
    %281 = vmatprep.mubr.f32.mxu0 0.0
    %282 = vmatmul.mubr.f32.gmra.mxu0 %v203
    %v283 = vpop.f32.mrf.mxu0
    %v284 = vadd.f32 %v186, %v283
    %v285 = vpop.f32.mrf.mxu0
    %v286 = vadd.f32 %v186, %v285
    %287 = vmatprep.mubr.f32.mxu0 0.0
    %288 = vmatmul.mubr.f32.gmra.mxu0 %v206
    %v289 = vpop.f32.mrf.mxu0
    %v290 = vadd.f32 %v191, %v289
    %v291 = vpop.f32.mrf.mxu0
    %v292 = vadd.f32 %v191, %v291
    %293 = vmatprep.mubr.f32.mxu0 0.0
    %294 = vmatmul.mubr.f32.gmra.mxu0 %v209
    %v295 = vpop.f32.mrf.mxu0
    %v296 = vadd.f32 %v196, %v295
    %v297 = vpop.f32.mrf.mxu0
    %v298 = vadd.f32 %v196, %v297
    %299 = vdwg.mxu0
    %v300 = vtanh.pop %v278
    %v301 = vtanh.pop %v280
    %v302 = vtanh.pop %v284
    %v303 = vtanh.pop %v286
    %v304 = vtanh.pop %v290
    %v305 = vtanh.pop %v292
    %v306 = vtanh.pop %v296
    %v307 = vtanh.pop %v298
    %v308 = vld [vmem:[%s5] sm:$0xff]
    %v309 = vld [vmem:[%s5 + $0x8] sm:$0xff]
    %v310 = vld [vmem:[%s5 + $0x10] sm:$0xff]
    %v311 = vld [vmem:[%s5 + $0x18] sm:$0xff]
    %313 = vset.pattern.permute.xlu0 0
    %314 = vperm.xlu0 %313, %v308
    %v315 = vpop.permute.xlu0 %314
    %318 = vset.pattern.permute.xlu0 0
    %319 = vperm.xlu0 %318, %v309
    %v320 = vpop.permute.xlu0 %319
    %323 = vset.pattern.permute.xlu0 0
    %324 = vperm.xlu0 %323, %v310
    %v325 = vpop.permute.xlu0 %324
    %328 = vset.pattern.permute.xlu0 0
    %329 = vperm.xlu0 %328, %v311
    %v330 = vpop.permute.xlu0 %329
    %v332 = vmul.f32 %v315, %v300
    %v333 = vmul.f32 %v315, %v301
    %v334 = vmul.f32 %v320, %v302
    %v335 = vmul.f32 %v320, %v303
    %v336 = vmul.f32 %v325, %v304
    %v337 = vmul.f32 %v325, %v305
    %v338 = vmul.f32 %v330, %v306
    %v339 = vmul.f32 %v330, %v307
    %v340 = vadd.f32 %v332, %v334
    %v341 = vadd.f32 %v340, %v336
    %v342 = vadd.f32 %v341, %v338
    %v343 = vrot.slane %v342, 4
    %v344 = vadd.f32 %v342, %v343
    %v345 = vrot.slane %v344, 2
    %v346 = vadd.f32 %v344, %v345
    %v347 = vrot.slane %v346, 1
    %v348 = vadd.f32 %v346, %v347
    %v349 = vadd.f32 %v333, %v335
    %v350 = vadd.f32 %v349, %v337
    %v351 = vadd.f32 %v350, %v339
    %v352 = vrot.slane %v351, 4
    %v353 = vadd.f32 %v351, %v352
    %v354 = vrot.slane %v353, 2
    %v355 = vadd.f32 %v353, %v354
    %v356 = vrot.slane %v355, 1
    %v357 = vadd.f32 %v355, %v356
    %s358 = sld [smem:[#allocation2]]
    %v359 = vstv %s358
    %v360 = vadd.f32 %v348, %v359
    %v361 = vadd.f32 %v357, %v359
    %v362 = vmul.f32 %v360, 0.5
    %v363 = vmul.f32 %v361, 0.5
    %v364 = vtanh.pop %v362
    %v365 = vtanh.pop %v363
    %v366 = vadd.f32 %v364, 1.0
    %v367 = vadd.f32 %v365, 1.0
    %v368 = vmul.f32 %v366, 0.5
    %v369 = vmul.f32 %v367, 0.5
    %v372 = vcombine.low %v368, %v369
    %v374 = vunpack.c.l.s4 1966171168
    %v375 = vunpack.c.0.s8 %v374
    %v376 = vlaneseq
    %v377 = vshrl.u32 %v376, 7
    %v378 = vsub.s32 %v375, %v377
    %v379 = vrot.slane %v372, %v378
    %v381 = vunpack.c.l.s4 1966171168
    %v382 = vunpack.c.0.s8 %v381
    %v383 = vlaneseq
    %v384 = vshrl.u32 %v383, 7
    %v385 = vsub.s32 %v382, %v384
    %v386 = vrot.slane %v379, %v385
    %v388 = vlaneseq
    %vm389 = vcmp.ge.s32.totalorder %v388, 0
    %vm390 = vcmp.lt.s32.totalorder %v388, 256
    %vm391 = vmand %vm389, %vm390
    %392 = vst.msk [vmem:[#allocation3] sm:$0x3] %vm391, %v386
    // Predicated region
    $region30: #{tpu_custom_call.1} parent=1 // pred_check
      _
    $region31: #{tpu_custom_call.1} parent=1 // pred_check_branch
      %394 = sbr.rel (0) target = $region33
    $region32: #{tpu_custom_call.1} parent=1 // pred_region
      %s396 = ssub.s32 32, 32
      %397 = vsyncadd [#allocation4], %s396
      %s399 = sshll.u32 [#allocation3], 4
      %s400 = int_to_ptr.vmem [resolvable:$true] %s399
      %402 = dma.vmem_to_hbm [thread:$0]  %s400, 32, %s7, [#allocation4]
    $region33: #{tpu_custom_call.1} parent=1 // pred_fallthru
      _
    // Predicated region
    $region34: #{tpu_custom_call.1} parent=1 // pred_check
      _
    $region35: #{tpu_custom_call.1} parent=1 // pred_check_branch
      %404 = sbr.rel (0) target = $region37
    $region36: #{tpu_custom_call.1} parent=1 // pred_region
      %405 = dma.done [#allocation4], 32
    $region37: #{tpu_custom_call.1} parent=1 // pred_fallthru
      _
    %406 = vsyncpa [#allocation4], 1

</llo_original>
